<compile_context>
chip_gen: v7x
topology: tpu7x:2x2x1
jax: 0.10.0
libtpu: 0.0.40
codegen_flags: <defaults>
</compile_context>

<pallas_src>
import functools

import jax
import jax.numpy as jnp
from jax.experimental import pallas as pl
from jax.experimental.pallas import tpu as pltpu


def _round_up(x, m):
    return ((x + m - 1) // m) * m


def _cdiv(a, b):
    return -(-a // b)


def _actor_ddpg_kernel(x_ref, w123_ref, w4_ref, b_ref, o_ref):
    """Fused 4-layer MLP forward on one batch tile.

    x_ref    : (TILE_B, in_p)        f32 activations (zero-padded columns)
    w123_ref : (in_p + 2*h_p, h_p)   packed W1/W2/W3 (param dtype)
    w4_ref   : (h_p, out_p)          W4 (param dtype)
    b_ref    : (8, w_max)            f32 biases; row i = b_{i+1}
    o_ref    : (TILE_B, output_size) tanh output at its true width
    """
    in_p = x_ref.shape[1]
    h_p = w123_ref.shape[1]
    out_p = w4_ref.shape[1]
    out_size = o_ref.shape[1]

    cdt = w123_ref.dtype                       # MXU operand dtype (f32 or bf16)
    x = x_ref[...]
    if x.dtype != cdt:
        x = x.astype(cdt)

    bias = b_ref[...]                          # one aligned (8, w_max) f32 load

    w1 = w123_ref[0:in_p, :]
    w2 = w123_ref[in_p:in_p + h_p, :]
    w3 = w123_ref[in_p + h_p:in_p + 2 * h_p, :]

    h = jnp.dot(x, w1, preferred_element_type=jnp.float32) + bias[0:1, :h_p]
    h = jnp.maximum(h, 0.0)
    if cdt != jnp.float32:
        h = h.astype(cdt)

    h = jnp.dot(h, w2, preferred_element_type=jnp.float32) + bias[1:2, :h_p]
    h = jnp.maximum(h, 0.0)
    if cdt != jnp.float32:
        h = h.astype(cdt)

    h = jnp.dot(h, w3, preferred_element_type=jnp.float32) + bias[2:3, :h_p]
    h = jnp.maximum(h, 0.0)
    if cdt != jnp.float32:
        h = h.astype(cdt)

    h = jnp.dot(h, w4_ref[...], preferred_element_type=jnp.float32) + bias[3:4, :out_p]
    # Slice to the true output width before tanh/store: no wasted EUP work and
    # the masked store only covers real columns.
    o_ref[...] = jnp.tanh(h[:, :out_size]).astype(o_ref.dtype)


def recommended_param_dtype():
    """bf16 weights on v6e/v7x (bf16 VPU + 256x256 MXU); f32 on v5e and older."""
    try:
        kind = jax.devices()[0].device_kind.lower()
    except Exception:
        return jnp.float32
    if "v6" in kind or "v7" in kind:
        return jnp.bfloat16
    return jnp.float32


def pack_actor_ddpg_params(params, input_size, hidden_size, output_size,
                           dtype=jnp.float32):
    """Packs the 8 parameter tensors into 3 lane-dense, resident buffers.

    Do this once outside the per-step call.  Layout:
      w123 : (in_p + 2*h_p, h_p)  rows [0,in_p)=W1, [in_p,in_p+h_p)=W2, rest=W3
      w4   : (h_p, out_p)
      b    : (8, max(h_p, out_p)) f32, row i = b_{i+1}  (biases stay f32)
    in_p is rounded to 16 so every row-slice offset is sublane-aligned even
    for bf16-packed weights.
    """
    in_p = _round_up(max(input_size, 1), 16)
    h_p = _round_up(max(hidden_size, 1), 128)
    out_p = _round_up(max(output_size, 1), 128)
    w_max = max(h_p, out_p)

    def pad2(a, rows, cols):
        a = jnp.asarray(a, jnp.float32)
        return jnp.pad(a, ((0, rows - a.shape[0]), (0, cols - a.shape[1])))

    w123 = jnp.concatenate([pad2(params["w1"], in_p, h_p),
                            pad2(params["w2"], h_p, h_p),
                            pad2(params["w3"], h_p, h_p)], axis=0).astype(dtype)
    w4 = pad2(params["w4"], h_p, out_p).astype(dtype)

    biases = jnp.zeros((8, w_max), jnp.float32)
    for i in range(4):
        b = jnp.asarray(params[f"b{i + 1}"], jnp.float32).reshape(-1)
        biases = biases.at[i, :b.shape[0]].set(b)

    return {"w123": w123, "w4": w4, "b": biases}


@functools.partial(jax.jit,
                   static_argnames=("input_size", "hidden_size", "output_size"))
def actor_ddpg_forward(state, packed, *, input_size, hidden_size, output_size):
    """Fused Actor_DDPG forward: relu(L1) -> relu(L2) -> relu(L3) -> tanh(L4).

    state  : (B, input_size) float32
    packed : output of pack_actor_ddpg_params
    """
    in_p = _round_up(max(input_size, 1), 16)
    h_p = _round_up(max(hidden_size, 1), 128)
    out_p = _round_up(max(output_size, 1), 128)

    B = state.shape[0]
    # Few, big batch tiles (per-grid-step overhead dwarfs these tiny matmuls),
    # sized so b_pad stays close to B; >=2 tiles for B > 16 feeds both v7x TCs.
    cap = max(256, min(4096, (4 << 20) // max(1, 4 * in_p)))
    min_tiles = 2 if B > 16 else 1
    n_tiles = max(min_tiles, _cdiv(B, cap))
    tile_b = _round_up(_cdiv(B, n_tiles), 8)
    n_tiles = _cdiv(B, tile_b)
    b_pad = n_tiles * tile_b

    x = jnp.asarray(state, jnp.float32)
    pad_b, pad_c = b_pad - B, in_p - input_size
    if pad_b or pad_c:
        x = jnp.pad(x, ((0, pad_b), (0, pad_c)))

    w123, w4, biases = packed["w123"], packed["w4"], packed["b"]
    p_itemsize = jnp.dtype(w123.dtype).itemsize
    param_bytes = ((w123.shape[0] * w123.shape[1]
                    + w4.shape[0] * w4.shape[1]) * p_itemsize
                   + biases.shape[0] * biases.shape[1] * 4)
    act_bytes = tile_b * (in_p + output_size) * 4
    # Double-buffered acts + resident params, with headroom for internal scratch.
    vmem_limit = int(min(max(4 * (param_bytes + act_bytes), 32 << 20), 128 << 20))

    cost = pl.CostEstimate(
        flops=2 * B * (input_size * hidden_size
                       + 2 * hidden_size * hidden_size
                       + hidden_size * output_size),
        transcendentals=B * output_size,
        bytes_accessed=4 * B * (input_size + output_size) + param_bytes,
    )

    out = pl.pallas_call(
        _actor_ddpg_kernel,
        out_shape=jax.ShapeDtypeStruct((b_pad, output_size), jnp.float32),
        grid=(n_tiles,),
        in_specs=[
            # Batch-tiled activations: double-buffered across grid steps.
            pl.BlockSpec((tile_b, in_p), lambda i: (i, 0)),
            # Parameter buffers: constant block index -> DMA'd once, resident.
            pl.BlockSpec(w123.shape, lambda i: (0, 0)),
            pl.BlockSpec(w4.shape, lambda i: (0, 0)),
            pl.BlockSpec(biases.shape, lambda i: (0, 0)),
        ],
        # Output at its true width: block last dim == full array dim.
        out_specs=pl.BlockSpec((tile_b, output_size), lambda i: (i, 0)),
        compiler_params=pltpu.CompilerParams(
            dimension_semantics=("parallel",),
            vmem_limit_bytes=vmem_limit),
        cost_estimate=cost,
    )(x, w123, w4, biases)

    return out if b_pad == B else out[:B]


def init_actor_ddpg_params(key, input_size, hidden_size, output_size):
    """Deterministic init mirroring nn.Linear's default U(-1/sqrt(fan_in), ...)."""
    dims = [(input_size, hidden_size),
            (hidden_size, hidden_size),
            (hidden_size, hidden_size),
            (hidden_size, output_size)]
    params = {}
    for i, (fan_in, fan_out) in enumerate(dims, start=1):
        key, kw, kb = jax.random.split(key, 3)
        bound = 1.0 / jnp.sqrt(jnp.float32(fan_in))
        params[f"w{i}"] = jax.random.uniform(
            kw, (fan_in, fan_out), jnp.float32, minval=-bound, maxval=bound)
        params[f"b{i}"] = jax.random.uniform(
            kb, (1, fan_out), jnp.float32, minval=-bound, maxval=bound)
    return params


def _reference_forward(state, params):
    h = jnp.maximum(state @ params["w1"] + params["b1"], 0.0)
    h = jnp.maximum(h @ params["w2"] + params["b2"], 0.0)
    h = jnp.maximum(h @ params["w3"] + params["b3"], 0.0)
    return jnp.tanh(h @ params["w4"] + params["b4"])


if __name__ == "__main__":
    key = jax.random.PRNGKey(0)

    # Config 1: small aligned shapes, exact f32 check.
    input_size, hidden_size, output_size = 16, 32, 8
    batch = 8
    key, k_params, k_state = jax.random.split(key, 3)
    params = init_actor_ddpg_params(k_params, input_size, hidden_size, output_size)
    state = jax.random.normal(k_state, (batch, input_size), jnp.float32)

    packed_f32 = pack_actor_ddpg_params(params, input_size, hidden_size,
                                        output_size, dtype=jnp.float32)
    out = actor_ddpg_forward(state, packed_f32, input_size=input_size,
                             hidden_size=hidden_size, output_size=output_size)
    out = jax.block_until_ready(out)
    ref = _reference_forward(state, params)
    assert out.shape == (batch, output_size)
    assert jnp.allclose(out, ref, atol=1e-4, rtol=1e-4), \
        "Pallas f32 output mismatch vs reference (config 1)"

    # Config 2: odd sizes exercise padding / masked-store paths (f32, exact).
    in2, hid2, out2, b2 = 10, 48, 3, 5
    key, kp2, ks2 = jax.random.split(key, 3)
    params2 = init_actor_ddpg_params(kp2, in2, hid2, out2)
    state2 = jax.random.normal(ks2, (b2, in2), jnp.float32)
    packed2 = pack_actor_ddpg_params(params2, in2, hid2, out2, dtype=jnp.float32)
    o2 = jax.block_until_ready(
        actor_ddpg_forward(state2, packed2, input_size=in2,
                           hidden_size=hid2, output_size=out2))
    r2 = _reference_forward(state2, params2)
    assert o2.shape == (b2, out2)
    assert jnp.allclose(o2, r2, atol=1e-4, rtol=1e-4), \
        "Pallas f32 output mismatch vs reference (config 2)"

    # bf16 weight packing (recommended dtype on v6e/v7x); biases/accum stay f32.
    packed_bf16 = pack_actor_ddpg_params(params, input_size, hidden_size,
                                         output_size, dtype=jnp.bfloat16)
    ob = jax.block_until_ready(
        actor_ddpg_forward(state, packed_bf16, input_size=input_size,
                           hidden_size=hidden_size, output_size=output_size))
    assert ob.shape == (batch, output_size)
    assert jnp.allclose(ob, ref, atol=5e-2, rtol=5e-2), \
        "Pallas bf16-weight output mismatch vs reference"

    print("KERNEL_OK")
</pallas_src>

<mosaic_0001>
module attributes {stable_mosaic.version = 11 : i64} {
  func.func @_actor_ddpg_kernel(%arg0: i32, %arg1: memref<8x16xf32, #tpu.memory_space<vmem>>, %arg2: memref<272x128xf32, #tpu.memory_space<vmem>>, %arg3: memref<128x128xf32, #tpu.memory_space<vmem>>, %arg4: memref<8x128xf32, #tpu.memory_space<vmem>>, %arg5: memref<8x8xf32, #tpu.memory_space<vmem>>) attributes {dimension_semantics = [#tpu.dimension_semantics<parallel>], iteration_bounds = array<i64: 1>, scalar_prefetch = 0 : i64, scratch_operands = 0 : i64, tpu.core_type = #tpu.core_type<tc>, window_params = [{transform_indices = @transform_0, window_bounds = array<i64: 8, 16>}, {pipeline_mode = #tpu.pipeline_mode<synchronous>, transform_indices = @transform_1, window_bounds = array<i64: 272, 128>}, {pipeline_mode = #tpu.pipeline_mode<synchronous>, transform_indices = @transform_2, window_bounds = array<i64: 128, 128>}, {pipeline_mode = #tpu.pipeline_mode<synchronous>, transform_indices = @transform_3, window_bounds = array<i64: 8, 128>}, {transform_indices = @transform_4, window_bounds = array<i64: 8, 8>}]} {
    %c0 = arith.constant 0 : index
    %c0_0 = arith.constant 0 : index
    %0 = vector.load %arg1[%c0, %c0_0] : memref<8x16xf32, #tpu.memory_space<vmem>>, vector<8x16xf32>
    %c0_1 = arith.constant 0 : index
    %c0_2 = arith.constant 0 : index
    %1 = vector.load %arg4[%c0_1, %c0_2] : memref<8x128xf32, #tpu.memory_space<vmem>>, vector<8x128xf32>
    %c0_3 = arith.constant 0 : index
    %c0_4 = arith.constant 0 : index
    %2 = vector.load %arg2[%c0_3, %c0_4] : memref<272x128xf32, #tpu.memory_space<vmem>>, vector<16x128xf32>
    %c16 = arith.constant 16 : index
    %c0_5 = arith.constant 0 : index
    %3 = vector.load %arg2[%c16, %c0_5] : memref<272x128xf32, #tpu.memory_space<vmem>>, vector<128x128xf32>
    %c144 = arith.constant 144 : index
    %c0_6 = arith.constant 0 : index
    %4 = vector.load %arg2[%c144, %c0_6] : memref<272x128xf32, #tpu.memory_space<vmem>>, vector<128x128xf32>
    %cst = arith.constant dense<0.000000e+00> : vector<8x128xf32>
    %5 = tpu.matmul %0, %2, %cst {dimension_numbers = #tpu.dot_dimension_numbers<[1], [0], [0], [1], [0, 0, 1, 1], [], []>} : vector<8x16xf32>, vector<16x128xf32>, vector<8x128xf32> -> vector<8x128xf32>
    %6 = vector.extract_strided_slice %1 {offsets = [0, 0], sizes = [1, 128], strides = [1, 1]} : vector<8x128xf32> to vector<1x128xf32>
    %7 = vector.broadcast %6 : vector<1x128xf32> to vector<8x128xf32>
    %8 = arith.addf %5, %7 : vector<8x128xf32>
    %cst_7 = arith.constant 0.000000e+00 : f32
    %9 = vector.broadcast %cst_7 : f32 to vector<8x128xf32>
    %10 = arith.maximumf %8, %9 : vector<8x128xf32>
    %cst_8 = arith.constant dense<0.000000e+00> : vector<8x128xf32>
    %11 = tpu.matmul %10, %3, %cst_8 {dimension_numbers = #tpu.dot_dimension_numbers<[1], [0], [0], [1], [0, 0, 1, 1], [], []>} : vector<8x128xf32>, vector<128x128xf32>, vector<8x128xf32> -> vector<8x128xf32>
    %12 = vector.extract_strided_slice %1 {offsets = [1, 0], sizes = [1, 128], strides = [1, 1]} : vector<8x128xf32> to vector<1x128xf32>
    %13 = vector.broadcast %12 : vector<1x128xf32> to vector<8x128xf32>
    %14 = arith.addf %11, %13 : vector<8x128xf32>
    %cst_9 = arith.constant 0.000000e+00 : f32
    %15 = vector.broadcast %cst_9 : f32 to vector<8x128xf32>
    %16 = arith.maximumf %14, %15 : vector<8x128xf32>
    %cst_10 = arith.constant dense<0.000000e+00> : vector<8x128xf32>
    %17 = tpu.matmul %16, %4, %cst_10 {dimension_numbers = #tpu.dot_dimension_numbers<[1], [0], [0], [1], [0, 0, 1, 1], [], []>} : vector<8x128xf32>, vector<128x128xf32>, vector<8x128xf32> -> vector<8x128xf32>
    %18 = vector.extract_strided_slice %1 {offsets = [2, 0], sizes = [1, 128], strides = [1, 1]} : vector<8x128xf32> to vector<1x128xf32>
    %19 = vector.broadcast %18 : vector<1x128xf32> to vector<8x128xf32>
    %20 = arith.addf %17, %19 : vector<8x128xf32>
    %cst_11 = arith.constant 0.000000e+00 : f32
    %21 = vector.broadcast %cst_11 : f32 to vector<8x128xf32>
    %22 = arith.maximumf %20, %21 : vector<8x128xf32>
    %c0_12 = arith.constant 0 : index
    %c0_13 = arith.constant 0 : index
    %23 = vector.load %arg3[%c0_12, %c0_13] : memref<128x128xf32, #tpu.memory_space<vmem>>, vector<128x128xf32>
    %cst_14 = arith.constant dense<0.000000e+00> : vector<8x128xf32>
    %24 = tpu.matmul %22, %23, %cst_14 {dimension_numbers = #tpu.dot_dimension_numbers<[1], [0], [0], [1], [0, 0, 1, 1], [], []>} : vector<8x128xf32>, vector<128x128xf32>, vector<8x128xf32> -> vector<8x128xf32>
    %25 = vector.extract_strided_slice %1 {offsets = [3, 0], sizes = [1, 128], strides = [1, 1]} : vector<8x128xf32> to vector<1x128xf32>
    %26 = vector.broadcast %25 : vector<1x128xf32> to vector<8x128xf32>
    %27 = arith.addf %24, %26 : vector<8x128xf32>
    %28 = vector.extract_strided_slice %27 {offsets = [0, 0], sizes = [8, 8], strides = [1, 1]} : vector<8x128xf32> to vector<8x8xf32>
    %29 = math.tanh %28 : vector<8x8xf32>
    %c0_15 = arith.constant 0 : index
    %c0_16 = arith.constant 0 : index
    %30 = vector.load %arg5[%c0_15, %c0_16] : memref<8x8xf32, #tpu.memory_space<vmem>>, vector<8x8xf32>
    tpu.vector_store %arg5[%c0_15, %c0_16], %29 {strides = array<i32>} : memref<8x8xf32, #tpu.memory_space<vmem>>, vector<8x8xf32>,
    return
  }
  func.func @transform_0(%arg0: i32) -> (i32, i32) {
    %c0_i32 = arith.constant 0 : i32
    %c0_i32_0 = arith.constant 0 : i32
    return %arg0, %c0_i32 : i32, i32
  }
  func.func @transform_1(%arg0: i32) -> (i32, i32) {
    %c0_i32 = arith.constant 0 : i32
    %c0_i32_0 = arith.constant 0 : i32
    %c0_i32_1 = arith.constant 0 : i32
    return %c0_i32, %c0_i32_0 : i32, i32
  }
  func.func @transform_2(%arg0: i32) -> (i32, i32) {
    %c0_i32 = arith.constant 0 : i32
    %c0_i32_0 = arith.constant 0 : i32
    %c0_i32_1 = arith.constant 0 : i32
    return %c0_i32, %c0_i32_0 : i32, i32
  }
  func.func @transform_3(%arg0: i32) -> (i32, i32) {
    %c0_i32 = arith.constant 0 : i32
    %c0_i32_0 = arith.constant 0 : i32
    %c0_i32_1 = arith.constant 0 : i32
    return %c0_i32, %c0_i32_0 : i32, i32
  }
  func.func @transform_4(%arg0: i32) -> (i32, i32) {
    %c0_i32 = arith.constant 0 : i32
    %c0_i32_0 = arith.constant 0 : i32
    return %arg0, %c0_i32 : i32, i32
  }
}

</mosaic_0001>

<llo_original>
// kernel: actor_ddpg_forward.1
$region0: #{actor_ddpg_forward.1}
  #allocation0 [shape = 'u32[]', space=smem, size = 0x4, offset = 0x4, fixed_abs, tag = 'smem constant byte address 0x4 - core index']
  #allocation1 [shape = 'u32[144,128]{1,0:T(1,128)}', space=vmem, size = 0x12000, scoped, tag = 'internal scratch']
  %s0 = inlined_call_operand.hbm [shape: f32[8,16], index: 0, kind: input, shape index: {}]
  %s1 = inlined_call_operand.hbm [shape: f32[272,128], index: 1, kind: input, shape index: {}]
  %s2 = inlined_call_operand.hbm [shape: f32[128,128], index: 2, kind: input, shape index: {}]
  %s3 = inlined_call_operand.hbm [shape: f32[8,128], index: 3, kind: input, shape index: {}]
  %s4 = inlined_call_operand.hbm [shape: f32[8,8], index: 4, kind: output, shape index: {}]
  %s5 = sld [smem:[#allocation0]]
  $region42: #{actor_ddpg_forward.1} parent=0
    _
  %s7 = ssub.s32 1, %s5
  %s8 = scalar_select 0, %s7, %s5
  $region1: #{actor_ddpg_forward.1} parent=0
    #allocation2 [shape = 'u8[4096]{0}', space=vmem, size = 0x1000, scoped, tag = 'input window, operand 0, single buffered']
    #allocation3 [shape = 's32[1]{0}', space=sflag, size = 0x4, scoped, tag = 'scoped memory for actor_ddpg_forward.1']
    #allocation4 [shape = 's32[1]{0}', space=sflag, size = 0x4, scoped, tag = 'scoped memory for actor_ddpg_forward.1']
    #allocation5 [shape = 'u8[139264]{0}', space=vmem, size = 0x22000, scoped, tag = 'input window, operand 1, single buffered']
    #allocation6 [shape = 's32[1]{0}', space=sflag, size = 0x4, scoped, tag = 'scoped memory for actor_ddpg_forward.1']
    #allocation7 [shape = 'u8[65536]{0}', space=vmem, size = 0x10000, scoped, tag = 'input window, operand 2, single buffered']
    #allocation8 [shape = 'u8[4096]{0}', space=vmem, size = 0x1000, scoped, tag = 'input window, operand 3, single buffered']
    #allocation9 [shape = 's32[1]{0}', space=sflag, size = 0x4, scoped, tag = 'scoped memory for actor_ddpg_forward.1']
    #allocation10 [shape = 'u8[4096]{0}', space=vmem, size = 0x1000, scoped, tag = 'output window, operand 0, single buffered']
    %9 = vsyncpa [#allocation3], 0
    %10 = vsyncpa [#allocation6], 0
    %11 = vsyncpa [#allocation9], 0
    %12 = vsyncpa [#allocation4], 0
    // Predicated region
    $region2: #{actor_ddpg_forward.1} parent=1 // pred_check
      _
    $region3: #{actor_ddpg_forward.1} parent=1 // pred_check_branch
      %14 = sbr.rel (0) target = $region5
    $region4: #{actor_ddpg_forward.1} parent=1 // pred_region
      %s16 = ssub.s32 128, 128
      %17 = vsyncadd [#allocation3], %s16
      %s19 = sshll.u32 [#allocation2], 4
      %s20 = int_to_ptr.vmem [resolvable:$true] %s19
      %22 = dma.hbm_to_vmem [thread:$0]  %s0, 128, %s20, [#allocation3]
    $region5: #{actor_ddpg_forward.1} parent=1 // pred_fallthru
      _
    // Predicated region
    $region6: #{actor_ddpg_forward.1} parent=1 // pred_check
      _
    $region7: #{actor_ddpg_forward.1} parent=1 // pred_check_branch
      %24 = sbr.rel (0) target = $region9
    $region8: #{actor_ddpg_forward.1} parent=1 // pred_region
      %s26 = ssub.s32 4352, 4352
      %27 = vsyncadd [#allocation6], %s26
      %s28 = sshll.u32 [#allocation5], 4
      %s29 = int_to_ptr.vmem [resolvable:$true] %s28
      %34 = dma.hbm_to_vmem [thread:$0]  %s1, 4352, %s29, [#allocation6], 128, 128, 8
    $region9: #{actor_ddpg_forward.1} parent=1 // pred_fallthru
      _
    // Predicated region
    $region10: #{actor_ddpg_forward.1} parent=1 // pred_check
      _
    $region11: #{actor_ddpg_forward.1} parent=1 // pred_check_branch
      %36 = sbr.rel (0) target = $region13
    $region12: #{actor_ddpg_forward.1} parent=1 // pred_region
      %s38 = ssub.s32 2048, 2048
      %39 = vsyncadd [#allocation6], %s38
      %s40 = sshll.u32 [#allocation7], 4
      %s41 = int_to_ptr.vmem [resolvable:$true] %s40
      %46 = dma.hbm_to_vmem [thread:$0]  %s2, 2048, %s41, [#allocation6], 128, 128, 8
    $region13: #{actor_ddpg_forward.1} parent=1 // pred_fallthru
      _
    // Predicated region
    $region14: #{actor_ddpg_forward.1} parent=1 // pred_check
      _
    $region15: #{actor_ddpg_forward.1} parent=1 // pred_check_branch
      %48 = sbr.rel (0) target = $region17
    $region16: #{actor_ddpg_forward.1} parent=1 // pred_region
      %s50 = ssub.s32 128, 128
      %51 = vsyncadd [#allocation9], %s50
      %s53 = sshll.u32 [#allocation8], 4
      %s54 = int_to_ptr.vmem [resolvable:$true] %s53
      %56 = dma.hbm_to_vmem [thread:$0]  %s3, 128, %s54, [#allocation9]
    $region17: #{actor_ddpg_forward.1} parent=1 // pred_fallthru
      _
    // Predicated region
    $region18: #{actor_ddpg_forward.1} parent=1 // pred_check
      _
    $region19: #{actor_ddpg_forward.1} parent=1 // pred_check_branch
      %58 = sbr.rel (0) target = $region21
    $region20: #{actor_ddpg_forward.1} parent=1 // pred_region
      %59 = dma.done [#allocation3], 128
    $region21: #{actor_ddpg_forward.1} parent=1 // pred_fallthru
      _
    // Predicated region
    $region22: #{actor_ddpg_forward.1} parent=1 // pred_check
      _
    $region23: #{actor_ddpg_forward.1} parent=1 // pred_check_branch
      %61 = sbr.rel (0) target = $region25
    $region24: #{actor_ddpg_forward.1} parent=1 // pred_region
      %62 = dma.done [#allocation6], 4352
    $region25: #{actor_ddpg_forward.1} parent=1 // pred_fallthru
      _
    // Predicated region
    $region26: #{actor_ddpg_forward.1} parent=1 // pred_check
      _
    $region27: #{actor_ddpg_forward.1} parent=1 // pred_check_branch
      %64 = sbr.rel (0) target = $region29
    $region28: #{actor_ddpg_forward.1} parent=1 // pred_region
      %65 = dma.done [#allocation6], 2048
    $region29: #{actor_ddpg_forward.1} parent=1 // pred_fallthru
      _
    // Predicated region
    $region30: #{actor_ddpg_forward.1} parent=1 // pred_check
      _
    $region31: #{actor_ddpg_forward.1} parent=1 // pred_check_branch
      %67 = sbr.rel (0) target = $region33
    $region32: #{actor_ddpg_forward.1} parent=1 // pred_region
      %68 = dma.done [#allocation9], 128
    $region33: #{actor_ddpg_forward.1} parent=1 // pred_fallthru
      _
    %v69 = vld [vmem:[#allocation2] sm:$0xff]
    %v70 = vld [vmem:[#allocation8] sm:$0xff]
    %v71 = vld [vmem:[#allocation5] sm:$0xff]
    %v72 = vld [vmem:[#allocation5 + $0x8] sm:$0xff]
    %v73 = vld [vmem:[#allocation5 + $0x10] sm:$0xff]
    %v74 = vld [vmem:[#allocation5 + $0x18] sm:$0xff]
    %v75 = vld [vmem:[#allocation5 + $0x20] sm:$0xff]
    %v76 = vld [vmem:[#allocation5 + $0x28] sm:$0xff]
    %v77 = vld [vmem:[#allocation5 + $0x30] sm:$0xff]
    %v78 = vld [vmem:[#allocation5 + $0x38] sm:$0xff]
    %v79 = vld [vmem:[#allocation5 + $0x40] sm:$0xff]
    %v80 = vld [vmem:[#allocation5 + $0x48] sm:$0xff]
    %v81 = vld [vmem:[#allocation5 + $0x50] sm:$0xff]
    %v82 = vld [vmem:[#allocation5 + $0x58] sm:$0xff]
    %v83 = vld [vmem:[#allocation5 + $0x60] sm:$0xff]
    %v84 = vld [vmem:[#allocation5 + $0x68] sm:$0xff]
    %v85 = vld [vmem:[#allocation5 + $0x70] sm:$0xff]
    %v86 = vld [vmem:[#allocation5 + $0x78] sm:$0xff]
    %v87 = vld [vmem:[#allocation5 + $0x80] sm:$0xff]
    %v88 = vld [vmem:[#allocation5 + $0x88] sm:$0xff]
    %v89 = vld [vmem:[#allocation5 + $0x90] sm:$0xff]
    %v90 = vld [vmem:[#allocation5 + $0x98] sm:$0xff]
    %v91 = vld [vmem:[#allocation5 + $0xa0] sm:$0xff]
    %v92 = vld [vmem:[#allocation5 + $0xa8] sm:$0xff]
    %v93 = vld [vmem:[#allocation5 + $0xb0] sm:$0xff]
    %v94 = vld [vmem:[#allocation5 + $0xb8] sm:$0xff]
    %v95 = vld [vmem:[#allocation5 + $0xc0] sm:$0xff]
    %v96 = vld [vmem:[#allocation5 + $0xc8] sm:$0xff]
    %v97 = vld [vmem:[#allocation5 + $0xd0] sm:$0xff]
    %v98 = vld [vmem:[#allocation5 + $0xd8] sm:$0xff]
    %v99 = vld [vmem:[#allocation5 + $0xe0] sm:$0xff]
    %v100 = vld [vmem:[#allocation5 + $0xe8] sm:$0xff]
    %v101 = vld [vmem:[#allocation5 + $0xf0] sm:$0xff]
    %v102 = vld [vmem:[#allocation5 + $0xf8] sm:$0xff]
    %v103 = vld [vmem:[#allocation5 + $0x100] sm:$0xff]
    %v104 = vld [vmem:[#allocation5 + $0x108] sm:$0xff]
    %v105 = vlaneseq
    %v106 = vshrl.u32 %v105, 7
    %v107 = vsub.s32 0, %v106
    %v108 = vrot.slane %v70, %v107
    %vm109 = vcmask 130048
    %v111 = vsel %vm109, %v69, 0
    %113 = vmatprep.subr.mxu0 0.0
    %114 = vmatpush1.msra.mxu0 %v71
    %115 = vmatprep.subr.mxu0 0.0
    %116 = vmatpush1.msra.mxu0 %v72
    %117 = vmatprep.subr.mxu0 0.0
    %118 = vmatpush1.msra.mxu0 0.0
    %119 = vmatprep.subr.mxu0 0.0
    %120 = vmatpush1.msra.mxu0 0.0
    %121 = vmatprep.subr.mxu0 0.0
    %122 = vmatpush1.msra.mxu0 0.0
    %123 = vmatprep.subr.mxu0 0.0
    %124 = vmatpush1.msra.mxu0 0.0
    %125 = vmatprep.subr.mxu0 0.0
    %126 = vmatpush1.msra.mxu0 0.0
    %127 = vmatprep.subr.mxu0 0.0
    %128 = vmatpush1.msra.mxu0 0.0
    %129 = vmatprep.subr.mxu0 0.0
    %130 = vmatpush1.msra.mxu0 0.0
    %131 = vmatprep.subr.mxu0 0.0
    %132 = vmatpush1.msra.mxu0 0.0
    %133 = vmatprep.subr.mxu0 0.0
    %134 = vmatpush1.msra.mxu0 0.0
    %135 = vmatprep.subr.mxu0 0.0
    %136 = vmatpush1.msra.mxu0 0.0
    %137 = vmatprep.subr.mxu0 0.0
    %138 = vmatpush1.msra.mxu0 0.0
    %139 = vmatprep.subr.mxu0 0.0
    %140 = vmatpush1.msra.mxu0 0.0
    %141 = vmatprep.subr.mxu0 0.0
    %142 = vmatpush1.msra.mxu0 0.0
    %143 = vmatprep.subr.mxu0 0.0
    %144 = vmatpush1.msra.mxu0 0.0
    %145 = vmatprep.subr.mxu0 0.0
    %146 = vmatpush1.msra.mxu0 0.0
    %147 = vmatprep.subr.mxu0 0.0
    %148 = vmatpush1.msra.mxu0 0.0
    %149 = vmatprep.subr.mxu0 0.0
    %150 = vmatpush1.msra.mxu0 0.0
    %151 = vmatprep.subr.mxu0 0.0
    %152 = vmatpush1.msra.mxu0 0.0
    %153 = vmatprep.subr.mxu0 0.0
    %154 = vmatpush1.msra.mxu0 0.0
    %155 = vmatprep.subr.mxu0 0.0
    %156 = vmatpush1.msra.mxu0 0.0
    %157 = vmatprep.subr.mxu0 0.0
    %158 = vmatpush1.msra.mxu0 0.0
    %159 = vmatprep.subr.mxu0 0.0
    %160 = vmatpush1.msra.mxu0 0.0
    %161 = vmatprep.subr.mxu0 0.0
    %162 = vmatpush1.msra.mxu0 0.0
    %163 = vmatprep.subr.mxu0 0.0
    %164 = vmatpush1.msra.mxu0 0.0
    %165 = vmatprep.subr.mxu0 0.0
    %166 = vmatpush1.msra.mxu0 0.0
    %167 = vmatprep.subr.mxu0 0.0
    %168 = vmatpush1.msra.mxu0 0.0
    %169 = vmatprep.subr.mxu0 0.0
    %170 = vmatpush1.msra.mxu0 0.0
    %171 = vmatprep.subr.mxu0 0.0
    %172 = vmatpush1.msra.mxu0 0.0
    %173 = vmatprep.subr.mxu0 0.0
    %174 = vmatpush1.msra.mxu0 0.0
    %175 = vmatprep.subr.mxu0 0.0
    %176 = vmatpush1.msra.mxu0 0.0
    %177 = vmatprep.mubr.f32.mxu0 0.0
    %178 = vmatmul.mubr.f32.gmra.mrb[0].mxu0 %v111
    %v179 = vpop.f32.mrb[0].mxu0
    %v180 = vadd.f32 %v108, %v179
    %v181 = vpop.f32.mrb[0].mxu0
    %182 = vdwg.mxu0
    %v183 = vmax.f32 %v180, 0.0
    %v184 = vlaneseq
    %v185 = vshrl.u32 %v184, 7
    %v186 = vsub.s32 1, %v185
    %v187 = vrot.slane %v70, %v186
    %188 = vmatprep.subr.mxu0 0.0
    %189 = vmatpush1.msra.mxu0 %v73
    %190 = vmatprep.subr.mxu0 0.0
    %191 = vmatpush1.msra.mxu0 %v74
    %192 = vmatprep.subr.mxu0 0.0
    %193 = vmatpush1.msra.mxu0 %v75
    %194 = vmatprep.subr.mxu0 0.0
    %195 = vmatpush1.msra.mxu0 %v76
    %196 = vmatprep.subr.mxu0 0.0
    %197 = vmatpush1.msra.mxu0 %v77
    %198 = vmatprep.subr.mxu0 0.0
    %199 = vmatpush1.msra.mxu0 %v78
    %200 = vmatprep.subr.mxu0 0.0
    %201 = vmatpush1.msra.mxu0 %v79
    %202 = vmatprep.subr.mxu0 0.0
    %203 = vmatpush1.msra.mxu0 %v80
    %204 = vmatprep.subr.mxu0 0.0
    %205 = vmatpush1.msra.mxu0 %v81
    %206 = vmatprep.subr.mxu0 0.0
    %207 = vmatpush1.msra.mxu0 %v82
    %208 = vmatprep.subr.mxu0 0.0
    %209 = vmatpush1.msra.mxu0 %v83
    %210 = vmatprep.subr.mxu0 0.0
    %211 = vmatpush1.msra.mxu0 %v84
    %212 = vmatprep.subr.mxu0 0.0
    %213 = vmatpush1.msra.mxu0 %v85
    %214 = vmatprep.subr.mxu0 0.0
    %215 = vmatpush1.msra.mxu0 %v86
    %216 = vmatprep.subr.mxu0 0.0
    %217 = vmatpush1.msra.mxu0 %v87
    %218 = vmatprep.subr.mxu0 0.0
    %219 = vmatpush1.msra.mxu0 %v88
    %220 = vmatprep.subr.mxu0 0.0
    %221 = vmatpush1.msra.mxu0 0.0
    %222 = vmatprep.subr.mxu0 0.0
    %223 = vmatpush1.msra.mxu0 0.0
    %224 = vmatprep.subr.mxu0 0.0
    %225 = vmatpush1.msra.mxu0 0.0
    %226 = vmatprep.subr.mxu0 0.0
    %227 = vmatpush1.msra.mxu0 0.0
    %228 = vmatprep.subr.mxu0 0.0
    %229 = vmatpush1.msra.mxu0 0.0
    %230 = vmatprep.subr.mxu0 0.0
    %231 = vmatpush1.msra.mxu0 0.0
    %232 = vmatprep.subr.mxu0 0.0
    %233 = vmatpush1.msra.mxu0 0.0
    %234 = vmatprep.subr.mxu0 0.0
    %235 = vmatpush1.msra.mxu0 0.0
    %236 = vmatprep.subr.mxu0 0.0
    %237 = vmatpush1.msra.mxu0 0.0
    %238 = vmatprep.subr.mxu0 0.0
    %239 = vmatpush1.msra.mxu0 0.0
    %240 = vmatprep.subr.mxu0 0.0
    %241 = vmatpush1.msra.mxu0 0.0
    %242 = vmatprep.subr.mxu0 0.0
    %243 = vmatpush1.msra.mxu0 0.0
    %244 = vmatprep.subr.mxu0 0.0
    %245 = vmatpush1.msra.mxu0 0.0
    %246 = vmatprep.subr.mxu0 0.0
    %247 = vmatpush1.msra.mxu0 0.0
    %248 = vmatprep.subr.mxu0 0.0
    %249 = vmatpush1.msra.mxu0 0.0
    %250 = vmatprep.subr.mxu0 0.0
    %251 = vmatpush1.msra.mxu0 0.0
    %252 = vmatprep.mubr.f32.mxu0 0.0
    %253 = vmatmul.mubr.f32.gmra.mrb[0].mxu0 %v183
    %v254 = vpop.f32.mrb[0].mxu0
    %v255 = vadd.f32 %v187, %v254
    %v256 = vpop.f32.mrb[0].mxu0
    %257 = vdwg.mxu0
    %v258 = vmax.f32 %v255, 0.0
    %v259 = vlaneseq
    %v260 = vshrl.u32 %v259, 7
    %v261 = vsub.s32 2, %v260
    %v262 = vrot.slane %v70, %v261
    %263 = vmatprep.subr.mxu0 0.0
    %264 = vmatpush1.msra.mxu0 %v89
    %265 = vmatprep.subr.mxu0 0.0
    %266 = vmatpush1.msra.mxu0 %v90
    %267 = vmatprep.subr.mxu0 0.0
    %268 = vmatpush1.msra.mxu0 %v91
    %269 = vmatprep.subr.mxu0 0.0
    %270 = vmatpush1.msra.mxu0 %v92
    %271 = vmatprep.subr.mxu0 0.0
    %272 = vmatpush1.msra.mxu0 %v93
    %273 = vmatprep.subr.mxu0 0.0
    %274 = vmatpush1.msra.mxu0 %v94
    %275 = vmatprep.subr.mxu0 0.0
    %276 = vmatpush1.msra.mxu0 %v95
    %277 = vmatprep.subr.mxu0 0.0
    %278 = vmatpush1.msra.mxu0 %v96
    %279 = vmatprep.subr.mxu0 0.0
    %280 = vmatpush1.msra.mxu0 %v97
    %281 = vmatprep.subr.mxu0 0.0
    %282 = vmatpush1.msra.mxu0 %v98
    %283 = vmatprep.subr.mxu0 0.0
    %284 = vmatpush1.msra.mxu0 %v99
    %285 = vmatprep.subr.mxu0 0.0
    %286 = vmatpush1.msra.mxu0 %v100
    %287 = vmatprep.subr.mxu0 0.0
    %288 = vmatpush1.msra.mxu0 %v101
    %289 = vmatprep.subr.mxu0 0.0
    %290 = vmatpush1.msra.mxu0 %v102
    %291 = vmatprep.subr.mxu0 0.0
    %292 = vmatpush1.msra.mxu0 %v103
    %293 = vmatprep.subr.mxu0 0.0
    %294 = vmatpush1.msra.mxu0 %v104
    %295 = vmatprep.subr.mxu0 0.0
    %296 = vmatpush1.msra.mxu0 0.0
    %297 = vmatprep.subr.mxu0 0.0
    %298 = vmatpush1.msra.mxu0 0.0
    %299 = vmatprep.subr.mxu0 0.0
    %300 = vmatpush1.msra.mxu0 0.0
    %301 = vmatprep.subr.mxu0 0.0
    %302 = vmatpush1.msra.mxu0 0.0
    %303 = vmatprep.subr.mxu0 0.0
    %304 = vmatpush1.msra.mxu0 0.0
    %305 = vmatprep.subr.mxu0 0.0
    %306 = vmatpush1.msra.mxu0 0.0
    %307 = vmatprep.subr.mxu0 0.0
    %308 = vmatpush1.msra.mxu0 0.0
    %309 = vmatprep.subr.mxu0 0.0
    %310 = vmatpush1.msra.mxu0 0.0
    %311 = vmatprep.subr.mxu0 0.0
    %312 = vmatpush1.msra.mxu0 0.0
    %313 = vmatprep.subr.mxu0 0.0
    %314 = vmatpush1.msra.mxu0 0.0
    %315 = vmatprep.subr.mxu0 0.0
    %316 = vmatpush1.msra.mxu0 0.0
    %317 = vmatprep.subr.mxu0 0.0
    %318 = vmatpush1.msra.mxu0 0.0
    %319 = vmatprep.subr.mxu0 0.0
    %320 = vmatpush1.msra.mxu0 0.0
    %321 = vmatprep.subr.mxu0 0.0
    %322 = vmatpush1.msra.mxu0 0.0
    %323 = vmatprep.subr.mxu0 0.0
    %324 = vmatpush1.msra.mxu0 0.0
    %325 = vmatprep.subr.mxu0 0.0
    %326 = vmatpush1.msra.mxu0 0.0
    %327 = vmatprep.mubr.f32.mxu0 0.0
    %328 = vmatmul.mubr.f32.gmra.mrb[0].mxu0 %v258
    %v329 = vpop.f32.mrb[0].mxu0
    %v330 = vadd.f32 %v262, %v329
    %v331 = vpop.f32.mrb[0].mxu0
    %332 = vdwg.mxu0
    %v333 = vmax.f32 %v330, 0.0
    %v334 = vld [vmem:[#allocation7] sm:$0xff]
    %v335 = vld [vmem:[#allocation7 + $0x8] sm:$0xff]
    %v336 = vld [vmem:[#allocation7 + $0x10] sm:$0xff]
    %v337 = vld [vmem:[#allocation7 + $0x18] sm:$0xff]
    %v338 = vld [vmem:[#allocation7 + $0x20] sm:$0xff]
    %v339 = vld [vmem:[#allocation7 + $0x28] sm:$0xff]
    %v340 = vld [vmem:[#allocation7 + $0x30] sm:$0xff]
    %v341 = vld [vmem:[#allocation7 + $0x38] sm:$0xff]
    %v342 = vld [vmem:[#allocation7 + $0x40] sm:$0xff]
    %v343 = vld [vmem:[#allocation7 + $0x48] sm:$0xff]
    %v344 = vld [vmem:[#allocation7 + $0x50] sm:$0xff]
    %v345 = vld [vmem:[#allocation7 + $0x58] sm:$0xff]
    %v346 = vld [vmem:[#allocation7 + $0x60] sm:$0xff]
    %v347 = vld [vmem:[#allocation7 + $0x68] sm:$0xff]
    %v348 = vld [vmem:[#allocation7 + $0x70] sm:$0xff]
    %v349 = vld [vmem:[#allocation7 + $0x78] sm:$0xff]
    %v350 = vlaneseq
    %v351 = vshrl.u32 %v350, 7
    %v352 = vsub.s32 3, %v351
    %v353 = vrot.slane %v70, %v352
    %354 = vmatprep.subr.mxu0 0.0
    %355 = vmatpush1.msra.mxu0 %v334
    %356 = vmatprep.subr.mxu0 0.0
    %357 = vmatpush1.msra.mxu0 %v335
    %358 = vmatprep.subr.mxu0 0.0
    %359 = vmatpush1.msra.mxu0 %v336
    %360 = vmatprep.subr.mxu0 0.0
    %361 = vmatpush1.msra.mxu0 %v337
    %362 = vmatprep.subr.mxu0 0.0
    %363 = vmatpush1.msra.mxu0 %v338
    %364 = vmatprep.subr.mxu0 0.0
    %365 = vmatpush1.msra.mxu0 %v339
    %366 = vmatprep.subr.mxu0 0.0
    %367 = vmatpush1.msra.mxu0 %v340
    %368 = vmatprep.subr.mxu0 0.0
    %369 = vmatpush1.msra.mxu0 %v341
    %370 = vmatprep.subr.mxu0 0.0
    %371 = vmatpush1.msra.mxu0 %v342
    %372 = vmatprep.subr.mxu0 0.0
    %373 = vmatpush1.msra.mxu0 %v343
    %374 = vmatprep.subr.mxu0 0.0
    %375 = vmatpush1.msra.mxu0 %v344
    %376 = vmatprep.subr.mxu0 0.0
    %377 = vmatpush1.msra.mxu0 %v345
    %378 = vmatprep.subr.mxu0 0.0
    %379 = vmatpush1.msra.mxu0 %v346
    %380 = vmatprep.subr.mxu0 0.0
    %381 = vmatpush1.msra.mxu0 %v347
    %382 = vmatprep.subr.mxu0 0.0
    %383 = vmatpush1.msra.mxu0 %v348
    %384 = vmatprep.subr.mxu0 0.0
    %385 = vmatpush1.msra.mxu0 %v349
    %386 = vmatprep.subr.mxu0 0.0
    %387 = vmatpush1.msra.mxu0 0.0
    %388 = vmatprep.subr.mxu0 0.0
    %389 = vmatpush1.msra.mxu0 0.0
    %390 = vmatprep.subr.mxu0 0.0
    %391 = vmatpush1.msra.mxu0 0.0
    %392 = vmatprep.subr.mxu0 0.0
    %393 = vmatpush1.msra.mxu0 0.0
    %394 = vmatprep.subr.mxu0 0.0
    %395 = vmatpush1.msra.mxu0 0.0
    %396 = vmatprep.subr.mxu0 0.0
    %397 = vmatpush1.msra.mxu0 0.0
    %398 = vmatprep.subr.mxu0 0.0
    %399 = vmatpush1.msra.mxu0 0.0
    %400 = vmatprep.subr.mxu0 0.0
    %401 = vmatpush1.msra.mxu0 0.0
    %402 = vmatprep.subr.mxu0 0.0
    %403 = vmatpush1.msra.mxu0 0.0
    %404 = vmatprep.subr.mxu0 0.0
    %405 = vmatpush1.msra.mxu0 0.0
    %406 = vmatprep.subr.mxu0 0.0
    %407 = vmatpush1.msra.mxu0 0.0
    %408 = vmatprep.subr.mxu0 0.0
    %409 = vmatpush1.msra.mxu0 0.0
    %410 = vmatprep.subr.mxu0 0.0
    %411 = vmatpush1.msra.mxu0 0.0
    %412 = vmatprep.subr.mxu0 0.0
    %413 = vmatpush1.msra.mxu0 0.0
    %414 = vmatprep.subr.mxu0 0.0
    %415 = vmatpush1.msra.mxu0 0.0
    %416 = vmatprep.subr.mxu0 0.0
    %417 = vmatpush1.msra.mxu0 0.0
    %418 = vmatprep.mubr.f32.mxu0 0.0
    %419 = vmatmul.mubr.f32.gmra.mrb[0].mxu0 %v333
    %v420 = vpop.f32.mrb[0].mxu0
    %v421 = vadd.f32 %v353, %v420
    %v422 = vpop.f32.mrb[0].mxu0
    %423 = vdwg.mxu0
    %v424 = vtanh.pop %v421
    %vm425 = vcmask 64512
    %426 = vst.msk [vmem:[#allocation10] sm:$0xff] %vm425, %v424
    // Predicated region
    $region34: #{actor_ddpg_forward.1} parent=1 // pred_check
      _
    $region35: #{actor_ddpg_forward.1} parent=1 // pred_check_branch
      %428 = sbr.rel (0) target = $region37
    $region36: #{actor_ddpg_forward.1} parent=1 // pred_region
      %s430 = ssub.s32 128, 128
      %431 = vsyncadd [#allocation4], %s430
      %s433 = sshll.u32 [#allocation10], 4
      %s434 = int_to_ptr.vmem [resolvable:$true] %s433
      %436 = dma.vmem_to_hbm [thread:$0]  %s434, 128, %s4, [#allocation4]
    $region37: #{actor_ddpg_forward.1} parent=1 // pred_fallthru
      _
    // Predicated region
    $region38: #{actor_ddpg_forward.1} parent=1 // pred_check
      _
    $region39: #{actor_ddpg_forward.1} parent=1 // pred_check_branch
      %438 = sbr.rel (0) target = $region41
    $region40: #{actor_ddpg_forward.1} parent=1 // pred_region
      %439 = dma.done [#allocation4], 128
    $region41: #{actor_ddpg_forward.1} parent=1 // pred_fallthru
      _
    %440 = vsyncpa [#allocation3], 1
    %441 = vsyncpa [#allocation6], 1
    %442 = vsyncpa [#allocation9], 1
    %443 = vsyncpa [#allocation4], 1

</llo_original>
